<compile_context>
chip_gen: v7x
topology: tpu7x:2x2x1
jax: 0.10.0
libtpu: 0.0.40
codegen_flags: <defaults>
</compile_context>

<pallas_src>
import functools

import jax
import jax.numpy as jnp
from jax.experimental import pallas as pl
from jax.experimental.pallas import tpu as pltpu


def _attention_kernel(dec_ref, enc_ref, out_ref, m_sc, l_sc, acc_sc, *,
                      s_enc, t_k, h_true, fuse_l, use_bf16, mask_k):
    # dec_ref: (..., Tq, Hp), enc_ref: (..., Tk, Hp), out_ref: (..., Tq, Hp)
    k_idx = pl.program_id(2)

    @pl.when(k_idx == 0)
    def _init():
        m_sc[...] = jnp.full_like(m_sc, -jnp.inf)
        l_sc[...] = jnp.zeros_like(l_sc)
        acc_sc[...] = jnp.zeros_like(acc_sc)

    dec = dec_ref[...]
    enc = enc_ref[...]
    if use_bf16:
        # Native bf16 MXU path (f32 accumulation via preferred_element_type).
        dec = dec.astype(jnp.bfloat16)
        enc = enc.astype(jnp.bfloat16)

    batched = dec.ndim == 3

    # scores[..., q, k] = <dec_q, enc_k>; contraction on H, no transpose.
    if batched:
        s = jnp.einsum("bqd,bkd->bqk", dec, enc,
                       preferred_element_type=jnp.float32)
    else:
        s = jax.lax.dot_general(dec, enc, (((1,), (1,)), ((), ())),
                                preferred_element_type=jnp.float32)

    if mask_k:
        # Padded keys (global index >= true S_enc) contribute nothing.
        k0 = k_idx * t_k
        kpos = k0 + jax.lax.broadcasted_iota(jnp.int32, s.shape, s.ndim - 1)
        s = jnp.where(kpos < s_enc, s, -jnp.inf)

    # Online softmax over the S_enc (lane) axis.
    m_prev = m_sc[...]
    m_new = jnp.maximum(m_prev, s.max(axis=-1, keepdims=True))
    alpha = jnp.exp(m_prev - m_new)
    p = jnp.exp(s - m_new)                      # unnormalized probabilities

    if not fuse_l:
        # Separate running denominator (only needed when H is already 128-dense
        # and there is no spare padded column to fuse it into the PV matmul).
        l_sc[...] = alpha * l_sc[...] + p.sum(axis=-1, keepdims=True)

    p_mm = p.astype(jnp.bfloat16) if use_bf16 else p.astype(enc.dtype)
    if batched:
        pv = jnp.einsum("bqk,bkd->bqd", p_mm, enc,
                        preferred_element_type=jnp.float32)
    else:
        pv = jax.lax.dot_general(p_mm, enc, (((1,), (0,)), ((), ())),
                                 preferred_element_type=jnp.float32)
    acc_sc[...] = alpha * acc_sc[...] + pv
    m_sc[...] = m_new

    @pl.when(k_idx == pl.num_programs(2) - 1)
    def _finalize():
        acc = acc_sc[...]
        if fuse_l:
            # enc's padded column `h_true` holds ones, so the PV matmul already
            # accumulated the softmax denominator there.
            l = acc[..., h_true:h_true + 1]
        else:
            l = l_sc[...]
        inv_l = pl.reciprocal(l, approx=use_bf16)   # exact in the f32 test mode
        out_ref[...] = (acc * inv_l).astype(out_ref.dtype)


def _round_up(x, m):
    return ((x + m - 1) // m) * m


def _largest_divisor_at_most(n, cap):
    for d in range(max(1, min(n, cap)), 0, -1):
        if n % d == 0:
            return d
    return 1


@functools.partial(jax.jit, static_argnames=("tq", "tk", "b_block", "use_bf16"))
def attention(enc_output: jax.Array, dec_output: jax.Array,
              *, tq: int = 512, tk: int = 1024, b_block: int | None = None,
              use_bf16: bool = True) -> jax.Array:
    """Pallas TPU equivalent of Attention.forward.

    enc_output: (B, S_enc, H)
    dec_output: (B, S_dec, H)
    returns:    (B, S_dec, H)
    """
    B, S_enc, H = enc_output.shape
    Bd, S_dec, Hd = dec_output.shape
    assert B == Bd and H == Hd

    # Lane-dense hidden dim: pad H up to a multiple of 128.  The first padded
    # enc column is set to 1.0 so the PV matmul produces the softmax
    # denominator for free (fuse_l).
    Hp = _round_up(H, 128)
    fuse_l = Hp > H

    # Tile sizes: capped at targets (no unbounded full-extent fallback), key
    # tile a multiple of 128 (lane axis of scores), query tile a multiple of 8.
    tq_eff = max(8, (tq // 8) * 8)
    tk_eff = max(128, (tk // 128) * 128)
    Tq = min(tq_eff, _round_up(S_dec, 8))
    Tk = min(tk_eff, _round_up(S_enc, 128))
    S_dec_p = _round_up(S_dec, Tq)
    S_enc_p = _round_up(S_enc, Tk)
    mask_k = S_enc_p > S_enc

    if b_block is None:
        if S_enc_p * S_dec_p <= 128 * 128 and B > 1:
            # Tiny per-batch work: block several batches per step to amortize
            # the ~0.35us/step overhead, but keep >= 2 parallel grid steps so
            # both v7x TensorCores get work.
            b_block = _largest_divisor_at_most(B, max(1, B // 2))
        else:
            b_block = 1
    Bblk = b_block if (B % b_block == 0) else 1
    batched = Bblk > 1

    # Wrapper-side padding (layout plumbing; sliced off after the call).
    enc_p = enc_output
    dec_p = dec_output
    if Hp > H or S_enc_p > S_enc:
        enc_p = jnp.pad(enc_p, ((0, 0), (0, S_enc_p - S_enc), (0, Hp - H)))
    if fuse_l:
        enc_p = enc_p.at[:, :, H].set(jnp.asarray(1.0, enc_p.dtype))
    if Hp > H or S_dec_p > S_dec:
        dec_p = jnp.pad(dec_p, ((0, 0), (0, S_dec_p - S_dec), (0, Hp - H)))

    grid = (B // Bblk, S_dec_p // Tq, S_enc_p // Tk)

    # When Bblk == 1 use a squeezed leading dim -> clean 2-D MXU matmuls.
    lead = (Bblk,) if batched else (pl.Squeezed(),)
    dec_spec = pl.BlockSpec(lead + (Tq, Hp), lambda b, q, k: (b, q, 0))
    enc_spec = pl.BlockSpec(lead + (Tk, Hp), lambda b, q, k: (b, k, 0))
    out_spec = pl.BlockSpec(lead + (Tq, Hp), lambda b, q, k: (b, q, 0))

    sshape = (Bblk, Tq) if batched else (Tq,)
    scratch_shapes = [
        pltpu.VMEM(sshape + (1,), jnp.float32),    # running max
        pltpu.VMEM(sshape + (1,), jnp.float32),    # running sum (unused if fuse_l)
        pltpu.VMEM(sshape + (Hp,), jnp.float32),   # output accumulator
    ]

    kernel = functools.partial(
        _attention_kernel, s_enc=S_enc, t_k=Tk, h_true=H,
        fuse_l=fuse_l, use_bf16=use_bf16, mask_k=mask_k)

    out = pl.pallas_call(
        kernel,
        out_shape=jax.ShapeDtypeStruct((B, S_dec_p, Hp), enc_output.dtype),
        grid_spec=pltpu.PrefetchScalarGridSpec(
            num_scalar_prefetch=0,
            grid=grid,
            in_specs=[dec_spec, enc_spec],
            out_specs=out_spec,
            scratch_shapes=scratch_shapes,
        ),
        compiler_params=pltpu.CompilerParams(
            dimension_semantics=("parallel", "parallel", "arbitrary"),
            # Above v5e's 16 MiB / v6e's 32 MiB scoped defaults, below v7x's
            # 64 MiB physical VMEM; actual usage with default tiles is ~10 MiB.
            vmem_limit_bytes=48 * 1024 * 1024,
        ),
    )(dec_p, enc_p)

    if S_dec_p > S_dec or Hp > H:
        out = out[:, :S_dec, :H]
    return out


def _attention_ref(enc_output, dec_output, *, cast=None):
    """Pure-JAX reference mirroring the PyTorch code.

    With cast=jnp.bfloat16 the matmul operands are rounded the same way the
    bf16-MXU kernel rounds them (f32 accumulation), for a tight comparison.
    """
    if cast is not None:
        enc_output = enc_output.astype(cast).astype(jnp.float32)
        dec_output = dec_output.astype(cast).astype(jnp.float32)
    a_t = jnp.einsum("bsh,bth->bst", enc_output, dec_output,
                     precision="highest")                      # (B, S_enc, S_dec)
    a_t = jax.nn.softmax(a_t, axis=1)                          # softmax over S_enc
    if cast is not None:
        a_t = a_t.astype(cast).astype(jnp.float32)
    c_t = jnp.einsum("bst,bsh->bth", a_t, enc_output,
                     precision="highest")                      # (B, S_dec, H)
    return c_t


if __name__ == "__main__":
    key = jax.random.PRNGKey(0)
    k1, k2, k3, k4, k5, k6 = jax.random.split(key, 6)

    # 1) Small shape, exact f32 mode (exercises H-pad, key masking, fused
    #    denominator, squeezed-batch 2-D matmul path).
    B, S_enc, S_dec, H = 2, 16, 8, 32
    enc = jax.random.normal(k1, (B, S_enc, H), dtype=jnp.float32)
    dec = jax.random.normal(k2, (B, S_dec, H), dtype=jnp.float32)

    out = jax.block_until_ready(attention(enc, dec, use_bf16=False))
    ref = _attention_ref(enc, dec)
    assert out.shape == (B, S_dec, H)
    assert jnp.allclose(out, ref, atol=1e-5, rtol=1e-5), "mismatch (small, f32)"

    # 2) Same shape, bf16-MXU mode vs a bf16-rounded reference.
    out_b = jax.block_until_ready(attention(enc, dec, use_bf16=True))
    ref_b = _attention_ref(enc, dec, cast=jnp.bfloat16)
    assert jnp.allclose(out_b, ref_b, atol=2e-2, rtol=2e-2), "mismatch (small, bf16)"

    # 3) Batched-block path (Bblk > 1), exact f32 mode.
    B3 = 4
    enc3 = jax.random.normal(k3, (B3, S_enc, H), dtype=jnp.float32)
    dec3 = jax.random.normal(k4, (B3, S_dec, H), dtype=jnp.float32)
    out3 = jax.block_until_ready(attention(enc3, dec3, use_bf16=False))
    ref3 = _attention_ref(enc3, dec3)
    assert jnp.allclose(out3, ref3, atol=1e-5, rtol=1e-5), "mismatch (batched, f32)"

    # 4) Multi-tile case: exercises the online-softmax reduction over S_enc
    #    tiles with the bf16 MXU path.
    B2, S_enc2, S_dec2, H2 = 2, 1024, 256, 128
    enc2 = jax.random.normal(k5, (B2, S_enc2, H2), dtype=jnp.float32)
    dec2 = jax.random.normal(k6, (B2, S_dec2, H2), dtype=jnp.float32)

    out2 = jax.block_until_ready(attention(enc2, dec2, tq=128, tk=256))
    ref2 = _attention_ref(enc2, dec2, cast=jnp.bfloat16)
    assert out2.shape == (B2, S_dec2, H2)
    assert jnp.allclose(out2, ref2, atol=2e-2, rtol=2e-2), "mismatch (tiled, bf16)"

    print("KERNEL_OK")
</pallas_src>

<mosaic_0001>
module attributes {stable_mosaic.version = 11 : i64} {
  func.func @_attention_kernel(%arg0: i32, %arg1: i32, %arg2: i32, %arg3: memref<1x8x128xf32, #tpu.memory_space<vmem>>, %arg4: memref<1x128x128xf32, #tpu.memory_space<vmem>>, %arg5: memref<1x8x128xf32, #tpu.memory_space<vmem>>, %arg6: memref<8x1xf32, #tpu.memory_space<vmem>>, %arg7: memref<8x1xf32, #tpu.memory_space<vmem>>, %arg8: memref<8x128xf32, #tpu.memory_space<vmem>>) attributes {dimension_semantics = [#tpu.dimension_semantics<parallel>, #tpu.dimension_semantics<parallel>, #tpu.dimension_semantics<arbitrary>], iteration_bounds = array<i64: 2, 1, 1>, scalar_prefetch = 0 : i64, scratch_operands = 3 : i64, tpu.core_type = #tpu.core_type<tc>, window_params = [{transform_indices = @transform_0, window_bounds = array<i64: 1, 8, 128>}, {transform_indices = @transform_1, window_bounds = array<i64: 1, 128, 128>}, {transform_indices = @transform_2, window_bounds = array<i64: 1, 8, 128>}]} {
    %c0_i32 = arith.constant 0 : i32
    %0 = arith.cmpi eq, %arg2, %c0_i32 : i32
    %1 = arith.extui %0 : i1 to i32
    %c0_i32_0 = arith.constant 0 : i32
    %2 = arith.cmpi ne, %1, %c0_i32_0 : i32
    scf.if %2 {
      %cst_19 = arith.constant 0xFF800000 : f32
      %35 = vector.broadcast %cst_19 : f32 to vector<8x1xf32>
      %c0_20 = arith.constant 0 : index
      %c0_21 = arith.constant 0 : index
      %36 = vector.load %arg6[%c0_20, %c0_21] : memref<8x1xf32, #tpu.memory_space<vmem>>, vector<8x1xf32>
      tpu.vector_store %arg6[%c0_20, %c0_21], %35 {strides = array<i32>} : memref<8x1xf32, #tpu.memory_space<vmem>>, vector<8x1xf32>,
      %cst_22 = arith.constant 0.000000e+00 : f32
      %37 = vector.broadcast %cst_22 : f32 to vector<8x1xf32>
      %c0_23 = arith.constant 0 : index
      %c0_24 = arith.constant 0 : index
      %38 = vector.load %arg7[%c0_23, %c0_24] : memref<8x1xf32, #tpu.memory_space<vmem>>, vector<8x1xf32>
      tpu.vector_store %arg7[%c0_23, %c0_24], %37 {strides = array<i32>} : memref<8x1xf32, #tpu.memory_space<vmem>>, vector<8x1xf32>,
      %cst_25 = arith.constant 0.000000e+00 : f32
      %39 = vector.broadcast %cst_25 : f32 to vector<8x128xf32>
      %c0_26 = arith.constant 0 : index
      %c0_27 = arith.constant 0 : index
      %40 = vector.load %arg8[%c0_26, %c0_27] : memref<8x128xf32, #tpu.memory_space<vmem>>, vector<8x128xf32>
      tpu.vector_store %arg8[%c0_26, %c0_27], %39 {strides = array<i32>} : memref<8x128xf32, #tpu.memory_space<vmem>>, vector<8x128xf32>,
    } else {
    }
    %c0 = arith.constant 0 : index
    %c0_1 = arith.constant 0 : index
    %c0_2 = arith.constant 0 : index
    %3 = vector.load %arg3[%c0, %c0_1, %c0_2] : memref<1x8x128xf32, #tpu.memory_space<vmem>>, vector<1x8x128xf32>
    %4 = vector.shape_cast %3 : vector<1x8x128xf32> to vector<8x128xf32>
    %c0_3 = arith.constant 0 : index
    %c0_4 = arith.constant 0 : index
    %c0_5 = arith.constant 0 : index
    %5 = vector.load %arg4[%c0_3, %c0_4, %c0_5] : memref<1x128x128xf32, #tpu.memory_space<vmem>>, vector<1x128x128xf32>
    %6 = vector.shape_cast %5 : vector<1x128x128xf32> to vector<128x128xf32>
    %cst = arith.constant dense<0.000000e+00> : vector<8x128xf32>
    %7 = tpu.matmul %4, %6, %cst {dimension_numbers = #tpu.dot_dimension_numbers<[1], [1], [0], [0], [0, 0, 1, 0], [], []>} : vector<8x128xf32>, vector<128x128xf32>, vector<8x128xf32> -> vector<8x128xf32>
    %c128_i32 = arith.constant 128 : i32
    %8 = arith.muli %arg2, %c128_i32 : i32
    %9 = tpu.iota {dimensions = array<i32: 1>} : vector<8x128xi32>
    %10 = vector.broadcast %8 : i32 to vector<8x128xi32>
    %11 = arith.addi %10, %9 : vector<8x128xi32>
    %c16_i32 = arith.constant 16 : i32
    %12 = vector.broadcast %c16_i32 : i32 to vector<8x128xi32>
    %13 = arith.cmpi slt, %11, %12 : vector<8x128xi32>
    %cst_6 = arith.constant 0xFF800000 : f32
    %14 = vector.broadcast %cst_6 : f32 to vector<8x128xf32>
    %15 = arith.select %13, %7, %14 : vector<8x128xi1>, vector<8x128xf32>
    %c0_7 = arith.constant 0 : index
    %c0_8 = arith.constant 0 : index
    %16 = vector.load %arg6[%c0_7, %c0_8] : memref<8x1xf32, #tpu.memory_space<vmem>>, vector<8x1xf32>
    %cst_9 = arith.constant dense<0xFF800000> : vector<8xf32>
    %17 = vector.multi_reduction <maximumf>, %15, %cst_9 [1] : vector<8x128xf32> to vector<8xf32>
    %18 = vector.shape_cast %17 : vector<8xf32> to vector<8x1xf32>
    %19 = arith.maximumf %16, %18 : vector<8x1xf32>
    %20 = arith.subf %16, %19 : vector<8x1xf32>
    %21 = math.exp %20 : vector<8x1xf32>
    %22 = vector.broadcast %19 : vector<8x1xf32> to vector<8x128xf32>
    %23 = arith.subf %15, %22 : vector<8x128xf32>
    %24 = math.exp %23 : vector<8x128xf32>
    %cst_10 = arith.constant dense<0.000000e+00> : vector<8x128xf32>
    %25 = tpu.matmul %24, %6, %cst_10 {dimension_numbers = #tpu.dot_dimension_numbers<[1], [0], [0], [1], [0, 0, 1, 1], [], []>} : vector<8x128xf32>, vector<128x128xf32>, vector<8x128xf32> -> vector<8x128xf32>
    %c0_11 = arith.constant 0 : index
    %c0_12 = arith.constant 0 : index
    %26 = vector.load %arg8[%c0_11, %c0_12] : memref<8x128xf32, #tpu.memory_space<vmem>>, vector<8x128xf32>
    %27 = vector.broadcast %21 : vector<8x1xf32> to vector<8x128xf32>
    %28 = arith.mulf %27, %26 : vector<8x128xf32>
    %29 = arith.addf %28, %25 : vector<8x128xf32>
    %c0_13 = arith.constant 0 : index
    %c0_14 = arith.constant 0 : index
    %30 = vector.load %arg8[%c0_13, %c0_14] : memref<8x128xf32, #tpu.memory_space<vmem>>, vector<8x128xf32>
    tpu.vector_store %arg8[%c0_13, %c0_14], %29 {strides = array<i32>} : memref<8x128xf32, #tpu.memory_space<vmem>>, vector<8x128xf32>,
    %c0_15 = arith.constant 0 : index
    %c0_16 = arith.constant 0 : index
    %31 = vector.load %arg6[%c0_15, %c0_16] : memref<8x1xf32, #tpu.memory_space<vmem>>, vector<8x1xf32>
    tpu.vector_store %arg6[%c0_15, %c0_16], %19 {strides = array<i32>} : memref<8x1xf32, #tpu.memory_space<vmem>>, vector<8x1xf32>,
    %c0_i32_17 = arith.constant 0 : i32
    %32 = arith.cmpi eq, %arg2, %c0_i32_17 : i32
    %33 = arith.extui %32 : i1 to i32
    %c0_i32_18 = arith.constant 0 : i32
    %34 = arith.cmpi ne, %33, %c0_i32_18 : i32
    scf.if %34 {
      %c0_19 = arith.constant 0 : index
      %c0_20 = arith.constant 0 : index
      %35 = vector.load %arg8[%c0_19, %c0_20] : memref<8x128xf32, #tpu.memory_space<vmem>>, vector<8x128xf32>
      %36 = vector.extract_strided_slice %35 {offsets = [0, 32], sizes = [8, 1], strides = [1, 1]} : vector<8x128xf32> to vector<8x1xf32>
      %37 = tpu.reciprocal %36 : vector<8x1xf32> -> vector<8x1xf32>
      %38 = vector.broadcast %37 : vector<8x1xf32> to vector<8x128xf32>
      %39 = arith.mulf %35, %38 : vector<8x128xf32>
      %c0_21 = arith.constant 0 : index
      %c0_22 = arith.constant 0 : index
      %c0_23 = arith.constant 0 : index
      %40 = vector.load %arg5[%c0_21, %c0_22, %c0_23] : memref<1x8x128xf32, #tpu.memory_space<vmem>>, vector<1x8x128xf32>
      %41 = vector.shape_cast %40 : vector<1x8x128xf32> to vector<8x128xf32>
      %42 = vector.shape_cast %39 : vector<8x128xf32> to vector<1x8x128xf32>
      tpu.vector_store %arg5[%c0_21, %c0_22, %c0_23], %42 {strides = array<i32>} : memref<1x8x128xf32, #tpu.memory_space<vmem>>, vector<1x8x128xf32>,
    } else {
    }
    return
  }
  func.func @transform_0(%arg0: i32, %arg1: i32, %arg2: i32) -> (i32, i32, i32) {
    %c0_i32 = arith.constant 0 : i32
    %c0_i32_0 = arith.constant 0 : i32
    return %arg0, %arg1, %c0_i32 : i32, i32, i32
  }
  func.func @transform_1(%arg0: i32, %arg1: i32, %arg2: i32) -> (i32, i32, i32) {
    %c0_i32 = arith.constant 0 : i32
    %c0_i32_0 = arith.constant 0 : i32
    return %arg0, %arg2, %c0_i32 : i32, i32, i32
  }
  func.func @transform_2(%arg0: i32, %arg1: i32, %arg2: i32) -> (i32, i32, i32) {
    %c0_i32 = arith.constant 0 : i32
    %c0_i32_0 = arith.constant 0 : i32
    return %arg0, %arg1, %c0_i32 : i32, i32, i32
  }
}

</mosaic_0001>

<llo_original>
// kernel: attention.1
$region0: #{attention.1}
  #allocation0 [shape = 'u32[]', space=smem, size = 0x4, offset = 0x4, fixed_abs, tag = 'smem constant byte address 0x4 - core index']
  #allocation1 [shape = 'u32[144,128]{1,0:T(1,128)}', space=vmem, size = 0x12000, scoped, tag = 'internal scratch']
  #allocation2 [shape = 'f32[8,1]{1,0:T(8,128)}', space=vmem, size = 0x1000, scoped, tag = 'scratch operand']
  #allocation3 [shape = 'f32[8,1]{1,0:T(8,128)}', space=vmem, size = 0x1000, scoped, tag = 'scratch operand']
  #allocation4 [shape = 'f32[8,128]{1,0:T(8,128)}', space=vmem, size = 0x1000, scoped, tag = 'scratch operand']
  %s0 = inlined_call_operand.vmem [shape: f32[2,8,128], index: 0, kind: input, shape index: {}]
  %s1 = inlined_call_operand.vmem [shape: f32[2,128,128], index: 1, kind: input, shape index: {}]
  %s2 = inlined_call_operand.hbm [shape: f32[2,8,128], index: 2, kind: output, shape index: {}]
  %s3 = sld [smem:[#allocation0]]
  $region49: #{attention.1} parent=0
    _
  %s5 = ssub.s32 1, %s3
  %s6 = scalar_select 0, %s5, %s3
  $region1: #{attention.1} parent=0
    #allocation5 [shape = 'u8[8192]{0}', space=vmem, size = 0x2000, scoped, tag = 'output window, operand 0']
    #allocation6 [shape = 's32[2]{0}', space=sflag, size = 0x8, scoped, tag = 'scoped memory for attention.1']
    %7 = vsyncpa [#allocation6], 0
    %s8 = scalar_lea.sflag [#allocation6], 1
    %9 = vsyncpa %s8, 0
    loop: start=0, step=1, limit=4
    $region2: #{attention.1} parent=1 // loop_pre_header
      _
    $region3: #{attention.1} parent=1 // loop_header
      %s11 = sphi 0, %s15
      %p12 = scmp.ge.s32.totalorder %s11, 4
      %s18 = sphi 0, %s37
      %s19 = sphi 0, %s33
      %s20 = sphi 0, %s29
      %s21 = sphi 0, %s18
      %s22 = sphi 0, %s19
      %s23 = sphi 0, %s20
      %s24 = sphi 0, %s21
      %s25 = sphi 0, %s22
      %s26 = sphi 0, %s23
      %s42 = sphi 0, %s44
      %s45 = sphi 0, %s42
      %s46 = sphi 0, %s45
      %s62 = sphi 0, %s46
      %s70 = sphi 0, %s72
      %s73 = sphi 0, %s70
      %s74 = sphi 0, %s73
      %s90 = sphi 0, %s74
      %s98 = sphi 0, %s100
      %s101 = sphi 0, %s98
      %s102 = sphi 0, %s101
      %s118 = sphi 0, %s102
    $region4: #{attention.1} parent=1 // loop_header_branch
      %14 = sbr.rel (%p12) target = $region8
    $region5: #{attention.1} parent=1 // loop_body
      %s16 = ssub.s32 %s11, 1
      %s17 = ssub.s32 %s11, 2
      %s27 = sadd.s32 1, %s20
      %p28 = scmp.ge.s32.totalorder %s27, 1
      %s29 = scalar_select %p28, 0, %s27
      %s30 = sadd.s32 1, %s19
      %s31 = scalar_select %p28, %s30, %s19
      %p32 = scmp.ge.s32.totalorder %s31, 1
      %s33 = scalar_select %p32, 0, %s31
      %s34 = sadd.s32 1, %s18
      %s35 = scalar_select %p32, %s34, %s18
      %p36 = scmp.ge.s32.totalorder %s35, 2
      %s37 = scalar_select %p36, 0, %s35
      %s38 = ssub.s32 %s18, %s37
      %s39 = ssub.s32 %s19, %s33
      %s40 = sor.u32 %s38, %s39
      %p41 = scmp.eq.s32.totalorder %s40, 0
      %s43 = sadd.s32 %s42, 1
      %s44 = scalar_select %p41, %s42, %s43
      %p47 = pneg %p41
      %p48 = scmp.eq.s32.totalorder %s11, 1
      %p49 = por %p47, %p48
      %p50 = scmp.ne.s32.totalorder %s42, %s45
      %p51 = scmp.eq.s32.totalorder %s11, 0
      %p52 = por %p50, %p51
      %p53 = scmp.ne.s32.totalorder %s42, %s45
      %p54 = scmp.eq.s32.totalorder %s16, 1
      %p55 = por %p53, %p54
      %p56 = scmp.ne.s32.totalorder %s45, %s46
      %p57 = scmp.eq.s32.totalorder %s16, 0
      %p58 = por %p56, %p57
      %p59 = scmp.ne.s32.totalorder %s45, %s46
      %p60 = scmp.eq.s32.totalorder %s17, 1
      %p61 = por %p59, %p60
      %p63 = scmp.ne.s32.totalorder %s46, %s62
      %p64 = scmp.eq.s32.totalorder %s17, 0
      %p65 = por %p63, %p64
      %s66 = ssub.s32 %s18, %s37
      %s67 = ssub.s32 %s20, %s29
      %s68 = sor.u32 %s66, %s67
      %p69 = scmp.eq.s32.totalorder %s68, 0
      %s71 = sadd.s32 %s70, 1
      %s72 = scalar_select %p69, %s70, %s71
      %p75 = pneg %p69
      %p76 = scmp.eq.s32.totalorder %s11, 1
      %p77 = por %p75, %p76
      %p78 = scmp.ne.s32.totalorder %s70, %s73
      %p79 = scmp.eq.s32.totalorder %s11, 0
      %p80 = por %p78, %p79
      %p81 = scmp.ne.s32.totalorder %s70, %s73
      %p82 = scmp.eq.s32.totalorder %s16, 1
      %p83 = por %p81, %p82
      %p84 = scmp.ne.s32.totalorder %s73, %s74
      %p85 = scmp.eq.s32.totalorder %s16, 0
      %p86 = por %p84, %p85
      %p87 = scmp.ne.s32.totalorder %s73, %s74
      %p88 = scmp.eq.s32.totalorder %s17, 1
      %p89 = por %p87, %p88
      %p91 = scmp.ne.s32.totalorder %s74, %s90
      %p92 = scmp.eq.s32.totalorder %s17, 0
      %p93 = por %p91, %p92
      %s94 = ssub.s32 %s18, %s37
      %s95 = ssub.s32 %s19, %s33
      %s96 = sor.u32 %s94, %s95
      %p97 = scmp.eq.s32.totalorder %s96, 0
      %s99 = sadd.s32 %s98, 1
      %s100 = scalar_select %p97, %s98, %s99
      %p103 = pneg %p97
      %p104 = scmp.eq.s32.totalorder %s11, 1
      %p105 = por %p103, %p104
      %p106 = scmp.ne.s32.totalorder %s98, %s101
      %p107 = scmp.eq.s32.totalorder %s11, 0
      %p108 = por %p106, %p107
      %p109 = scmp.ne.s32.totalorder %s98, %s101
      %p110 = scmp.eq.s32.totalorder %s16, 1
      %p111 = por %p109, %p110
      %p112 = scmp.ne.s32.totalorder %s101, %s102
      %p113 = scmp.eq.s32.totalorder %s16, 0
      %p114 = por %p112, %p113
      %p115 = scmp.ne.s32.totalorder %s101, %s102
      %p116 = scmp.eq.s32.totalorder %s17, 1
      %p117 = por %p115, %p116
      %p119 = scmp.ne.s32.totalorder %s102, %s118
      %p120 = scmp.eq.s32.totalorder %s17, 0
      %p121 = por %p119, %p120
      %p122 = scmp.le.s32.totalorder 1, %s11
      %p123 = scmp.lt.s32.totalorder %s11, 3
      %p124 = pnand %p122, %p123
      %p125 = pneg %p124
      // Predicated region
      $region9: #{attention.1} parent=5 // pred_check
        _
      $region10: #{attention.1} parent=5 // pred_check_branch
        %127 = sbr.rel (%p124) target = $region12
      $region11: #{attention.1} parent=5 // pred_region
        %s128 = ssub.s32 %s11, 1
      $region12: #{attention.1} parent=5 // pred_fallthru
        _
      %p129 = scmp.lt.s32.totalorder %s11, 2
      // Predicated region
      $region13: #{attention.1} parent=5 // pred_check
        %p130 = pneg %p129
      $region14: #{attention.1} parent=5 // pred_check_branch
        %132 = sbr.rel (%p130) target = $region16
      $region15: #{attention.1} parent=5 // pred_region
        // Predicated region
        $region17: #{attention.1} parent=15 // pred_check
          %p133 = pneg %p52
        $region18: #{attention.1} parent=15 // pred_check_branch
          %135 = sbr.rel (%p133) target = $region20
        $region19: #{attention.1} parent=15 // pred_region
          %p136 = scmp.lt.s32.totalorder %s18, 1
          %s137 = scalar_select %p136, %s18, 1
          %p138 = scmp.lt.s32.totalorder %s19, 0
          %s139 = scalar_select %p138, %s19, 0
          %s140 = sadd.s32 %s139, %s137
          %s141 = smul.addr %s140, 8
          %s142 = scalar_lea.vmem %s0, %s141
        $region20: #{attention.1} parent=15 // pred_fallthru
          _
        // Predicated region
        $region21: #{attention.1} parent=15 // pred_check
          %p143 = pneg %p80
        $region22: #{attention.1} parent=15 // pred_check_branch
          %145 = sbr.rel (%p143) target = $region24
        $region23: #{attention.1} parent=15 // pred_region
          %s146 = smul.u32 16, %s20
          %p147 = scmp.lt.s32.totalorder %s18, 1
          %s148 = scalar_select %p147, %s18, 1
          %p149 = scmp.lt.s32.totalorder %s146, 15
          %s150 = scalar_select %p149, %s146, 15
          %s151 = smul.addr %s148, 16
          %s152 = sadd.s32 %s150, %s151
          %s153 = smul.addr %s152, 8
          %s154 = scalar_lea.vmem %s1, %s153
          %s155 = smul.u32 16, %s20
        $region24: #{attention.1} parent=15 // pred_fallthru
          _
      $region16: #{attention.1} parent=5 // pred_fallthru
        _
      %p156 = scmp.le.s32.totalorder 1, %s11
      %p157 = scmp.lt.s32.totalorder %s11, 3
      %p158 = pnand %p156, %p157
      %p159 = pneg %p158
      // Predicated region
      $region25: #{attention.1} parent=5 // pred_check
        _
      $region26: #{attention.1} parent=5 // pred_check_branch
        %161 = sbr.rel (%p158) target = $region28
      $region27: #{attention.1} parent=5 // pred_region
        %s162 = ssub.s32 %s11, 1
        %p163 = scmp.lt.s32.totalorder %s21, 1
        %s164 = scalar_select %p163, %s21, 1
        %p165 = scmp.lt.s32.totalorder %s22, 0
        %s166 = scalar_select %p165, %s22, 0
        %s167 = sadd.s32 %s166, %s164
        %s168 = smul.addr %s167, 8
        %s169 = scalar_lea.vmem %s0, %s168
        %p170 = pneg %p58
        %p171 = pneg %p55
        %s172 = smul.u32 16, %s23
        %p173 = scmp.lt.s32.totalorder %s21, 1
        %s174 = scalar_select %p173, %s21, 1
        %p175 = scmp.lt.s32.totalorder %s172, 15
        %s176 = scalar_select %p175, %s172, 15
        %s177 = smul.addr %s174, 16
        %s178 = sadd.s32 %s176, %s177
        %s179 = smul.addr %s178, 8
        %s180 = scalar_lea.vmem %s1, %s179
        %p181 = pneg %p86
        %p182 = pneg %p83
        %p183 = pneg %p114
        %p184 = pneg %p111
        %s185 = sand.u32 %s101, 1
        %s186 = scalar_lea.sflag [#allocation6], %s185
        %s187 = sand.u32 %s101, 1
        %s188 = smul.addr %s187, 8
        %s189 = scalar_lea.vmem [#allocation5], %s188
        %p190 = scmp.lt.s32.totalorder %s21, 1
        %s191 = scalar_select %p190, %s21, 1
        %p192 = scmp.lt.s32.totalorder %s22, 0
        %s193 = scalar_select %p192, %s22, 0
        %s194 = sadd.s32 %s193, %s191
        %s195 = smul.addr %s194, 8
        %s196 = scalar_lea.vmem %s0, %s195
        %s197 = smul.u32 16, %s23
        %p198 = scmp.lt.s32.totalorder %s21, 1
        %s199 = scalar_select %p198, %s21, 1
        %p200 = scmp.lt.s32.totalorder %s197, 15
        %s201 = scalar_select %p200, %s197, 15
        %s202 = smul.addr %s199, 16
        %s203 = sadd.s32 %s201, %s202
        %s204 = smul.addr %s203, 8
        %s205 = scalar_lea.vmem %s1, %s204
        %s206 = smul.u32 16, %s23
        %p207 = scmp.eq.s32.totalorder %s23, 0
        // Predicated region
        $region29: #{attention.1} parent=27 // pred_check
          %p208 = pneg %p207
        $region30: #{attention.1} parent=27 // pred_check_branch
          %210 = sbr.rel (%p208) target = $region32
        $region31: #{attention.1} parent=27 // pred_region
          %vm211 = vcmask 7168
          %212 = vst.msk [vmem:[#allocation2] sm:$0xff] %vm211, -inf
          %213 = vst.msk [vmem:[#allocation3] sm:$0xff] %vm211, 0.0
          %214 = vst [vmem:[#allocation4] sm:$0xff] 0.0
        $region32: #{attention.1} parent=27 // pred_fallthru
          _
        %v215 = vld [vmem:[%s196] sm:$0xff]
        %v216 = vld [vmem:[%s205] sm:$0xff]
        %v217 = vld [vmem:[%s205 + $0x8] sm:$0xff]
        %v218 = vld [vmem:[%s205 + $0x10] sm:$0xff]
        %v219 = vld [vmem:[%s205 + $0x18] sm:$0xff]
        %v220 = vld [vmem:[%s205 + $0x20] sm:$0xff]
        %v221 = vld [vmem:[%s205 + $0x28] sm:$0xff]
        %v222 = vld [vmem:[%s205 + $0x30] sm:$0xff]
        %v223 = vld [vmem:[%s205 + $0x38] sm:$0xff]
        %v224 = vld [vmem:[%s205 + $0x40] sm:$0xff]
        %v225 = vld [vmem:[%s205 + $0x48] sm:$0xff]
        %v226 = vld [vmem:[%s205 + $0x50] sm:$0xff]
        %v227 = vld [vmem:[%s205 + $0x58] sm:$0xff]
        %v228 = vld [vmem:[%s205 + $0x60] sm:$0xff]
        %v229 = vld [vmem:[%s205 + $0x68] sm:$0xff]
        %v230 = vld [vmem:[%s205 + $0x70] sm:$0xff]
        %v231 = vld [vmem:[%s205 + $0x78] sm:$0xff]
        %232 = vmatprep.subr.mxu0 0.0
        %233 = vmatpush1.xpose.msra.mxu0 %v216
        %234 = vmatprep.subr.mxu0 0.0
        %235 = vmatpush1.xpose.msra.mxu0 %v217
        %236 = vmatprep.subr.mxu0 0.0
        %237 = vmatpush1.xpose.msra.mxu0 %v218
        %238 = vmatprep.subr.mxu0 0.0
        %239 = vmatpush1.xpose.msra.mxu0 %v219
        %240 = vmatprep.subr.mxu0 0.0
        %241 = vmatpush1.xpose.msra.mxu0 %v220
        %242 = vmatprep.subr.mxu0 0.0
        %243 = vmatpush1.xpose.msra.mxu0 %v221
        %244 = vmatprep.subr.mxu0 0.0
        %245 = vmatpush1.xpose.msra.mxu0 %v222
        %246 = vmatprep.subr.mxu0 0.0
        %247 = vmatpush1.xpose.msra.mxu0 %v223
        %248 = vmatprep.subr.mxu0 0.0
        %249 = vmatpush1.xpose.msra.mxu0 %v224
        %250 = vmatprep.subr.mxu0 0.0
        %251 = vmatpush1.xpose.msra.mxu0 %v225
        %252 = vmatprep.subr.mxu0 0.0
        %253 = vmatpush1.xpose.msra.mxu0 %v226
        %254 = vmatprep.subr.mxu0 0.0
        %255 = vmatpush1.xpose.msra.mxu0 %v227
        %256 = vmatprep.subr.mxu0 0.0
        %257 = vmatpush1.xpose.msra.mxu0 %v228
        %258 = vmatprep.subr.mxu0 0.0
        %259 = vmatpush1.xpose.msra.mxu0 %v229
        %260 = vmatprep.subr.mxu0 0.0
        %261 = vmatpush1.xpose.msra.mxu0 %v230
        %262 = vmatprep.subr.mxu0 0.0
        %263 = vmatpush1.xpose.msra.mxu0 %v231
        %264 = vmatprep.subr.mxu0 0.0
        %265 = vmatpush1.xpose.msra.mxu0 0.0
        %266 = vmatprep.subr.mxu0 0.0
        %267 = vmatpush1.xpose.msra.mxu0 0.0
        %268 = vmatprep.subr.mxu0 0.0
        %269 = vmatpush1.xpose.msra.mxu0 0.0
        %270 = vmatprep.subr.mxu0 0.0
        %271 = vmatpush1.xpose.msra.mxu0 0.0
        %272 = vmatprep.subr.mxu0 0.0
        %273 = vmatpush1.xpose.msra.mxu0 0.0
        %274 = vmatprep.subr.mxu0 0.0
        %275 = vmatpush1.xpose.msra.mxu0 0.0
        %276 = vmatprep.subr.mxu0 0.0
        %277 = vmatpush1.xpose.msra.mxu0 0.0
        %278 = vmatprep.subr.mxu0 0.0
        %279 = vmatpush1.xpose.msra.mxu0 0.0
        %280 = vmatprep.subr.mxu0 0.0
        %281 = vmatpush1.xpose.msra.mxu0 0.0
        %282 = vmatprep.subr.mxu0 0.0
        %283 = vmatpush1.xpose.msra.mxu0 0.0
        %284 = vmatprep.subr.mxu0 0.0
        %285 = vmatpush1.xpose.msra.mxu0 0.0
        %286 = vmatprep.subr.mxu0 0.0
        %287 = vmatpush1.xpose.msra.mxu0 0.0
        %288 = vmatprep.subr.mxu0 0.0
        %289 = vmatpush1.xpose.msra.mxu0 0.0
        %290 = vmatprep.subr.mxu0 0.0
        %291 = vmatpush1.xpose.msra.mxu0 0.0
        %292 = vmatprep.subr.mxu0 0.0
        %293 = vmatpush1.xpose.msra.mxu0 0.0
        %294 = vmatprep.subr.mxu0 0.0
        %295 = vmatpush1.xpose.msra.mxu0 0.0
        %296 = vmatprep.mubr.f32.mxu0 0.0
        %297 = vmatmul.mubr.f32.gmra.mrb[0].mxu0 %v215
        %v298 = vpop.f32.mrb[0].mxu0
        %v299 = vadd.f32 0.0, %v298
        %v300 = vpop.f32.mrb[0].mxu0
        %301 = vdwg.mxu0
        %s302 = smul.u32 %s23, 128
        %v303 = vlaneseq
        %v304 = vand.u32 %v303, 127
        %v305 = vstv %s302
        %v306 = vadd.s32 %v305, %v304
        %vm307 = vcmp.lt.s32.totalorder %v306, 16
        %v308 = vsel %vm307, %v299, -inf
        %v309 = vld [vmem:[#allocation2] sm:$0xff]
        %310 = vmax.xlane.f32.xlu0 %v308
        %v311 = vpop.xlane.xlu0 %310
        %v312 = vmax.f32 %v309, %v311
        %v313 = vsub.f32 %v309, %v312
        %v314 = vmul.f32 %v313, 1.442695
        %v315 = vpow.pop %v314
        %317 = vset.pattern.permute.xlu0 0
        %318 = vperm.xlu0 %317, %v312
        %v319 = vpop.permute.xlu0 %318
        %v321 = vsub.f32 %v308, %v319
        %v322 = vmul.f32 %v321, 1.442695
        %v323 = vpow.pop %v322
        %324 = vmatprep.subr.mxu0 0.0
        %325 = vmatpush1.msra.mxu0 %v216
        %326 = vmatprep.subr.mxu0 0.0
        %327 = vmatpush1.msra.mxu0 %v217
        %328 = vmatprep.subr.mxu0 0.0
        %329 = vmatpush1.msra.mxu0 %v218
        %330 = vmatprep.subr.mxu0 0.0
        %331 = vmatpush1.msra.mxu0 %v219
        %332 = vmatprep.subr.mxu0 0.0
        %333 = vmatpush1.msra.mxu0 %v220
        %334 = vmatprep.subr.mxu0 0.0
        %335 = vmatpush1.msra.mxu0 %v221
        %336 = vmatprep.subr.mxu0 0.0
        %337 = vmatpush1.msra.mxu0 %v222
        %338 = vmatprep.subr.mxu0 0.0
        %339 = vmatpush1.msra.mxu0 %v223
        %340 = vmatprep.subr.mxu0 0.0
        %341 = vmatpush1.msra.mxu0 %v224
        %342 = vmatprep.subr.mxu0 0.0
        %343 = vmatpush1.msra.mxu0 %v225
        %344 = vmatprep.subr.mxu0 0.0
        %345 = vmatpush1.msra.mxu0 %v226
        %346 = vmatprep.subr.mxu0 0.0
        %347 = vmatpush1.msra.mxu0 %v227
        %348 = vmatprep.subr.mxu0 0.0
        %349 = vmatpush1.msra.mxu0 %v228
        %350 = vmatprep.subr.mxu0 0.0
        %351 = vmatpush1.msra.mxu0 %v229
        %352 = vmatprep.subr.mxu0 0.0
        %353 = vmatpush1.msra.mxu0 %v230
        %354 = vmatprep.subr.mxu0 0.0
        %355 = vmatpush1.msra.mxu0 %v231
        %356 = vmatprep.subr.mxu0 0.0
        %357 = vmatpush1.msra.mxu0 0.0
        %358 = vmatprep.subr.mxu0 0.0
        %359 = vmatpush1.msra.mxu0 0.0
        %360 = vmatprep.subr.mxu0 0.0
        %361 = vmatpush1.msra.mxu0 0.0
        %362 = vmatprep.subr.mxu0 0.0
        %363 = vmatpush1.msra.mxu0 0.0
        %364 = vmatprep.subr.mxu0 0.0
        %365 = vmatpush1.msra.mxu0 0.0
        %366 = vmatprep.subr.mxu0 0.0
        %367 = vmatpush1.msra.mxu0 0.0
        %368 = vmatprep.subr.mxu0 0.0
        %369 = vmatpush1.msra.mxu0 0.0
        %370 = vmatprep.subr.mxu0 0.0
        %371 = vmatpush1.msra.mxu0 0.0
        %372 = vmatprep.subr.mxu0 0.0
        %373 = vmatpush1.msra.mxu0 0.0
        %374 = vmatprep.subr.mxu0 0.0
        %375 = vmatpush1.msra.mxu0 0.0
        %376 = vmatprep.subr.mxu0 0.0
        %377 = vmatpush1.msra.mxu0 0.0
        %378 = vmatprep.subr.mxu0 0.0
        %379 = vmatpush1.msra.mxu0 0.0
        %380 = vmatprep.subr.mxu0 0.0
        %381 = vmatpush1.msra.mxu0 0.0
        %382 = vmatprep.subr.mxu0 0.0
        %383 = vmatpush1.msra.mxu0 0.0
        %384 = vmatprep.subr.mxu0 0.0
        %385 = vmatpush1.msra.mxu0 0.0
        %386 = vmatprep.subr.mxu0 0.0
        %387 = vmatpush1.msra.mxu0 0.0
        %388 = vmatprep.mubr.f32.mxu0 0.0
        %389 = vmatmul.mubr.f32.gmra.mrb[0].mxu0 %v323
        %v390 = vpop.f32.mrb[0].mxu0
        %v391 = vadd.f32 0.0, %v390
        %v392 = vpop.f32.mrb[0].mxu0
        %393 = vdwg.mxu0
        %v394 = vld [vmem:[#allocation4] sm:$0xff]
        %396 = vset.pattern.permute.xlu0 0
        %397 = vperm.xlu0 %396, %v315
        %v398 = vpop.permute.xlu0 %397
        %v400 = vmul.f32 %v398, %v394
        %v401 = vadd.f32 %v400, %v391
        %402 = vst [vmem:[#allocation4] sm:$0xff] %v401
        %vm403 = vcmask 7168
        %404 = vst.msk [vmem:[#allocation2] sm:$0xff] %vm403, %v312
        // Predicated region
        $region33: #{attention.1} parent=27 // pred_check
          %p405 = pneg %p207
        $region34: #{attention.1} parent=27 // pred_check_branch
          %407 = sbr.rel (%p405) target = $region36
        $region35: #{attention.1} parent=27 // pred_region
          %v408 = vld [vmem:[#allocation4] sm:$0xff]
          %v409 = vrcp.pop %v408
          %411 = vset.pattern.permute.xlu0 32
          %412 = vperm.xlu0 %411, %v409
          %v413 = vpop.permute.xlu0 %412
          %v415 = vmul.f32 %v408, %v413
          %416 = vst [vmem:[%s189] sm:$0xff] %v415
        $region36: #{attention.1} parent=27 // pred_fallthru
          _
        %s417 = sand.u32 %s101, 1
        %s418 = scalar_lea.sflag [#allocation6], %s417
        %s419 = sand.u32 %s101, 1
        %s420 = smul.addr %s419, 8
        %s421 = scalar_lea.vmem [#allocation5], %s420
        // Predicated region
        $region37: #{attention.1} parent=27 // pred_check
          %p422 = pneg %p111
        $region38: #{attention.1} parent=27 // pred_check_branch
          %424 = sbr.rel (%p422) target = $region40
        $region39: #{attention.1} parent=27 // pred_region
          %s426 = ssub.s32 128, 128
          %427 = vsyncadd %s418, %s426
          %s428 = sadd.s32 %s22, %s21
          %s429 = smul.addr %s428, 128
          %s430 = scalar_lea.hbm %s2, %s429
          %s432 = sshll.u32 %s421, 4
          %s433 = int_to_ptr.vmem [resolvable:$true] %s432
          %435 = dma.vmem_to_hbm [thread:$0]  %s433, 128, %s430, %s418
        $region40: #{attention.1} parent=27 // pred_fallthru
          _
      $region28: #{attention.1} parent=5 // pred_fallthru
        _
      %p436 = scmp.le.s32.totalorder 2, %s11
      // Predicated region
      $region41: #{attention.1} parent=5 // pred_check
        %p437 = pneg %p436
      $region42: #{attention.1} parent=5 // pred_check_branch
        %439 = sbr.rel (%p437) target = $region44
      $region43: #{attention.1} parent=5 // pred_region
        %s440 = ssub.s32 %s11, 2
        // Predicated region
        $region45: #{attention.1} parent=43 // pred_check
          %p441 = pneg %p117
        $region46: #{attention.1} parent=43 // pred_check_branch
          %443 = sbr.rel (%p441) target = $region48
        $region47: #{attention.1} parent=43 // pred_region
          %s444 = sand.u32 %s102, 1
          %s445 = scalar_lea.sflag [#allocation6], %s444
          %s446 = sand.u32 %s102, 1
          %s447 = smul.addr %s446, 8
          %s448 = scalar_lea.vmem [#allocation5], %s447
          %449 = dma.done %s445, 128
        $region48: #{attention.1} parent=43 // pred_fallthru
          _
      $region44: #{attention.1} parent=5 // pred_fallthru
        _
    $region6: #{attention.1} parent=1 // loop_footer
      %s15 = sadd.s32 1, %s11
    $region7: #{attention.1} parent=1 // loop_footer_branch
      %10 = sbr.rel target = $region3
    $region8: #{attention.1} parent=1 // loop_exit
      _
    %450 = vsyncpa [#allocation6], 1
    %s451 = scalar_lea.sflag [#allocation6], 1
    %452 = vsyncpa %s451, 1

</llo_original>
